<compile_context>
chip_gen: v7x
topology: tpu7x:2x2x1
jax: 0.10.0
libtpu: 0.0.40
codegen_flags: <defaults>
</compile_context>

<pallas_src>
import math

import jax
import jax.numpy as jnp
from jax import lax
from jax.experimental import pallas as pl
from jax.experimental.pallas import tpu as pltpu


def _round_up(x: int, m: int) -> int:
    return ((x + m - 1) // m) * m


def _cdiv(a: int, b: int) -> int:
    return (a + b - 1) // b


# ----------------------------------------------------------------------------
# Pallas kernels: K = variance^2 * (X1 @ X2^T) + offset
# ----------------------------------------------------------------------------
def _linear_gram_kernel_fused(params_ref, x1_ref, x2_ref, o_ref):
    """Single-K-step variant: no accumulator, fused epilogue, one store per tile."""
    dot = lax.dot_general(
        x1_ref[...],
        x2_ref[...],
        dimension_numbers=(((1,), (1,)), ((), ())),  # contract last dims (no X2 transpose)
        preferred_element_type=jnp.float32,
    )
    offset = params_ref[0]
    variance = params_ref[1]
    o_ref[...] = ((variance * variance) * dot + offset).astype(o_ref.dtype)


def _linear_gram_kernel_ktiled(params_ref, x1_ref, x2_ref, o_ref):
    """K-tiled variant: accumulate directly into the resident f32 output block."""
    k = pl.program_id(2)

    @pl.when(k == 0)
    def _():
        o_ref[...] = jnp.zeros_like(o_ref)

    o_ref[...] += lax.dot_general(
        x1_ref[...],
        x2_ref[...],
        dimension_numbers=(((1,), (1,)), ((), ())),
        preferred_element_type=jnp.float32,
    )

    @pl.when(k == pl.num_programs(2) - 1)
    def _():
        offset = params_ref[0]
        variance = params_ref[1]
        o_ref[...] = ((variance * variance) * o_ref[...] + offset).astype(o_ref.dtype)


def linear_kernel_gram(x1, x2, offset, variance):
    """variance^2 * X1 @ X2^T + offset with a tiled, pipelined Pallas TPU kernel.

    x1: (N1, D), x2: (N2, D) in their native dtype (f32 or bf16).
    Returns an (N1, N2) float32 gram matrix.
    """
    n1, d = x1.shape
    n2, d2 = x2.shape
    assert d == d2, "X1 and X2 must share the feature dimension D"

    itemsize = jnp.dtype(x1.dtype).itemsize
    # Native sublane packing: 8 rows for 32-bit, 16 for bf16, 32 for 8-bit dtypes.
    sublane = max(8, 32 // max(itemsize, 1))

    MAX_TILE = 512  # ~85% of HBM roofline at 512-class tiles; fits scoped VMEM everywhere

    # ---- M / N tiling: minimize padding under the 512 cap ----------------------
    gm = _cdiv(n1, MAX_TILE)
    gn = _cdiv(n2, MAX_TILE)
    # v7x has 2 TensorCores; guarantee >=2 parallel output tiles when n1 allows it
    # (one extra ~0.35us grid step on v5e/v6e - negligible).
    if gm * gn == 1 and n1 >= 2 * sublane:
        gm = 2
    tm = _round_up(_cdiv(n1, gm), sublane)   # sublane-aligned M tile, minimal padding
    n1_pad = tm * gm
    tn = _round_up(_cdiv(n2, gn), 128)       # lane-dense N tile (unmasked vst)
    n2_pad = tn * gn

    # ---- K tiling: single step for d<=512; otherwise pick tk minimizing padding ----
    if d <= MAX_TILE:
        tk = _round_up(d, 128)
        d_pad = tk
    else:
        best_pad, tk = None, MAX_TILE
        for cand in (512, 256, 128):          # ties -> prefer the larger tile
            pad = _round_up(d, cand) - d
            if best_pad is None or pad < best_pad:
                best_pad, tk = pad, cand
        d_pad = _round_up(d, tk)
    gk = d_pad // tk

    # Zero-pad only where needed: padded rows/cols only produce `offset` entries,
    # which are sliced off below; zero-padding along D adds nothing to the dot.
    if (n1_pad, d_pad) != (n1, d):
        x1 = jnp.pad(x1, ((0, n1_pad - n1), (0, d_pad - d)))
    if (n2_pad, d_pad) != (n2, d):
        x2 = jnp.pad(x2, ((0, n2_pad - n2), (0, d_pad - d)))

    params = jnp.stack(
        [jnp.asarray(offset, jnp.float32), jnp.asarray(variance, jnp.float32)]
    )  # (2,) scalars, lives in SMEM

    # VMEM budget: double-buffered input tiles + double-buffered f32 output tile.
    tile_bytes = 2 * (tm * tk + tn * tk) * itemsize + 2 * tm * tn * 4
    vmem_limit = int(min(max(2 * tile_bytes, 32 * 1024 * 1024), 48 * 1024 * 1024))

    cost = pl.CostEstimate(
        flops=2 * n1_pad * n2_pad * d_pad,
        transcendentals=0,
        bytes_accessed=(n1_pad * d_pad + n2_pad * d_pad) * itemsize + n1_pad * n2_pad * 4,
    )

    if gk == 1:
        kernel = _linear_gram_kernel_fused
        grid = (gm, gn)
        in_specs = [
            pl.BlockSpec(memory_space=pltpu.SMEM),              # scalar params
            pl.BlockSpec((tm, tk), lambda i, j: (i, 0)),        # X1 tile
            pl.BlockSpec((tn, tk), lambda i, j: (j, 0)),        # X2 tile (natural layout)
        ]
        out_specs = pl.BlockSpec((tm, tn), lambda i, j: (i, j))
        dim_sem = ("parallel", "parallel")
    else:
        kernel = _linear_gram_kernel_ktiled
        grid = (gm, gn, gk)
        in_specs = [
            pl.BlockSpec(memory_space=pltpu.SMEM),
            pl.BlockSpec((tm, tk), lambda i, j, k: (i, k)),
            pl.BlockSpec((tn, tk), lambda i, j, k: (j, k)),
        ]
        # output block index ignores k -> tile stays resident in VMEM across the
        # reduction axis and doubles as the f32 accumulator (no scratch needed).
        out_specs = pl.BlockSpec((tm, tn), lambda i, j, k: (i, j))
        dim_sem = ("parallel", "parallel", "arbitrary")

    out = pl.pallas_call(
        kernel,
        out_shape=jax.ShapeDtypeStruct((n1_pad, n2_pad), jnp.float32),
        grid_spec=pltpu.PrefetchScalarGridSpec(
            num_scalar_prefetch=0,
            grid=grid,
            in_specs=in_specs,
            out_specs=out_specs,
        ),
        compiler_params=pltpu.CompilerParams(
            dimension_semantics=dim_sem,
            vmem_limit_bytes=vmem_limit,
        ),
        cost_estimate=cost,
    )(params, x1, x2)

    if (n1_pad, n2_pad) != (n1, n2):
        # Padded rows/cols hold `offset`, not zero - slice them off.
        out = out[:n1, :n2]
    return out


# ----------------------------------------------------------------------------
# Parameter glue: MLP(kernel_embedding) -> softplus -> (offset, variance)
# (STANDARD eval mode; dropout inactive at eval time)
# ----------------------------------------------------------------------------
def init_mlp_params(key, in_dim, hidden_dims, out_dim):
    """Deterministic MLP weight init (Linear layers with biases)."""
    dims = [in_dim] + list(hidden_dims) + [out_dim]
    params = []
    for i in range(len(dims) - 1):
        key, wk, bk = jax.random.split(key, 3)
        scale = 1.0 / math.sqrt(dims[i])
        w = jax.random.uniform(wk, (dims[i], dims[i + 1]), jnp.float32, -scale, scale)
        b = jax.random.uniform(bk, (dims[i + 1],), jnp.float32, -scale, scale)
        params.append((w, b))
    return params


def mlp_forward(params, x):
    # TODO(synk): exact MLP class (activation choice) not shown in the reference;
    # assuming Linear+bias with ReLU between hidden layers, dropout off in eval.
    h = x
    for i, (w, b) in enumerate(params):
        h = h @ w + b
        if i < len(params) - 1:
            h = jax.nn.relu(h)
    return h


def linear_kernel_forward(x1, x2, kernel_embedding, mlp_params):
    """Equivalent of LinearKernel.forward in STANDARD eval mode."""
    raw = mlp_forward(mlp_params, kernel_embedding)  # (2,)
    p = jax.nn.softplus(raw)
    offset = p[0]      # offset_index = 0
    variance = p[1]    # variance_index = 1
    return linear_kernel_gram(x1, x2, offset, variance)


# ----------------------------------------------------------------------------
# Pure-JAX reference for correctness check
# ----------------------------------------------------------------------------
def linear_kernel_reference(x1, x2, kernel_embedding, mlp_params):
    raw = mlp_forward(mlp_params, kernel_embedding)
    p = jax.nn.softplus(raw)
    offset, variance = p[0], p[1]
    return variance ** 2 * (x1 @ x2.T) + offset


if __name__ == "__main__":
    key = jax.random.PRNGKey(0)
    k_emb, k_x1, k_x2, k_mlp, k_x1b, k_x2b, k_x1c, k_x2c = jax.random.split(key, 8)

    kernel_embedding_dim = 16
    dim_hidden_layer_list = [32, 32]

    kernel_embedding = jax.random.normal(k_emb, (kernel_embedding_dim,), jnp.float32)
    mlp_params = init_mlp_params(k_mlp, kernel_embedding_dim, dim_hidden_layer_list, 2)

    # Small case matching the module's typical N1 x D / N2 x D inputs (fused path).
    n1, n2, d = 16, 8, 4
    x1 = jax.random.normal(k_x1, (n1, d), jnp.float32)
    x2 = jax.random.normal(k_x2, (n2, d), jnp.float32)

    out = linear_kernel_forward(x1, x2, kernel_embedding, mlp_params)
    out = jax.block_until_ready(out)
    ref = linear_kernel_reference(x1, x2, kernel_embedding, mlp_params)
    assert out.shape == (n1, n2)
    assert jnp.allclose(out, ref, atol=1e-5, rtol=1e-5), "mismatch vs reference (small)"

    # Larger, unaligned case exercising padding-minimizing tiles + multi-tile grid.
    n1b, n2b, db = 300, 200, 7
    x1b = jax.random.normal(k_x1b, (n1b, db), jnp.float32)
    x2b = jax.random.normal(k_x2b, (n2b, db), jnp.float32)

    outb = linear_kernel_forward(x1b, x2b, kernel_embedding, mlp_params)
    outb = jax.block_until_ready(outb)
    refb = linear_kernel_reference(x1b, x2b, kernel_embedding, mlp_params)
    assert outb.shape == (n1b, n2b)
    assert jnp.allclose(outb, refb, atol=1e-4, rtol=1e-4), "mismatch vs reference (large)"

    # Large-D case exercising the K-tiled accumulate-into-output path.
    n1c, n2c, dc = 48, 40, 600
    x1c = jax.random.normal(k_x1c, (n1c, dc), jnp.float32)
    x2c = jax.random.normal(k_x2c, (n2c, dc), jnp.float32)

    outc = linear_kernel_forward(x1c, x2c, kernel_embedding, mlp_params)
    outc = jax.block_until_ready(outc)
    refc = linear_kernel_reference(x1c, x2c, kernel_embedding, mlp_params)
    assert outc.shape == (n1c, n2c)
    assert jnp.allclose(outc, refc, atol=1e-3, rtol=1e-3), "mismatch vs reference (large D)"

    print("KERNEL_OK")
</pallas_src>

<mosaic_0001>
module attributes {stable_mosaic.version = 11 : i64} {
  func.func @_linear_gram_kernel_fused(%arg0: i32, %arg1: i32, %arg2: memref<2xf32, #tpu.memory_space<smem>>, %arg3: memref<8x128xf32, #tpu.memory_space<vmem>>, %arg4: memref<128x128xf32, #tpu.memory_space<vmem>>, %arg5: memref<8x128xf32, #tpu.memory_space<vmem>>) attributes {dimension_semantics = [#tpu.dimension_semantics<parallel>, #tpu.dimension_semantics<parallel>], iteration_bounds = array<i64: 2, 1>, scalar_prefetch = 0 : i64, scratch_operands = 0 : i64, tpu.core_type = #tpu.core_type<tc>, window_params = [{transform_indices = @transform_0, window_bounds = array<i64: 2>}, {transform_indices = @transform_1, window_bounds = array<i64: 8, 128>}, {transform_indices = @transform_2, window_bounds = array<i64: 128, 128>}, {transform_indices = @transform_3, window_bounds = array<i64: 8, 128>}]} {
    %c0 = arith.constant 0 : index
    %c0_0 = arith.constant 0 : index
    %0 = vector.load %arg3[%c0, %c0_0] : memref<8x128xf32, #tpu.memory_space<vmem>>, vector<8x128xf32>
    %c0_1 = arith.constant 0 : index
    %c0_2 = arith.constant 0 : index
    %1 = vector.load %arg4[%c0_1, %c0_2] : memref<128x128xf32, #tpu.memory_space<vmem>>, vector<128x128xf32>
    %cst = arith.constant dense<0.000000e+00> : vector<8x128xf32>
    %2 = tpu.matmul %0, %1, %cst {dimension_numbers = #tpu.dot_dimension_numbers<[1], [1], [0], [0], [0, 0, 1, 0], [], []>} : vector<8x128xf32>, vector<128x128xf32>, vector<8x128xf32> -> vector<8x128xf32>
    %c0_3 = arith.constant 0 : index
    %3 = memref.load %arg2[%c0_3] : memref<2xf32, #tpu.memory_space<smem>>
    %c1 = arith.constant 1 : index
    %4 = memref.load %arg2[%c1] : memref<2xf32, #tpu.memory_space<smem>>
    %5 = arith.mulf %4, %4 : f32
    %6 = vector.broadcast %5 : f32 to vector<8x128xf32>
    %7 = arith.mulf %6, %2 : vector<8x128xf32>
    %8 = vector.broadcast %3 : f32 to vector<8x128xf32>
    %9 = arith.addf %7, %8 : vector<8x128xf32>
    %c0_4 = arith.constant 0 : index
    %c0_5 = arith.constant 0 : index
    %10 = vector.load %arg5[%c0_4, %c0_5] : memref<8x128xf32, #tpu.memory_space<vmem>>, vector<8x128xf32>
    tpu.vector_store %arg5[%c0_4, %c0_5], %9 {strides = array<i32>} : memref<8x128xf32, #tpu.memory_space<vmem>>, vector<8x128xf32>,
    return
  }
  func.func @transform_0(%arg0: i32, %arg1: i32) -> i32 {
    %c0_i32 = arith.constant 0 : i32
    %c0_i32_0 = arith.constant 0 : i32
    return %c0_i32 : i32
  }
  func.func @transform_1(%arg0: i32, %arg1: i32) -> (i32, i32) {
    %c0_i32 = arith.constant 0 : i32
    %c0_i32_0 = arith.constant 0 : i32
    return %arg0, %c0_i32 : i32, i32
  }
  func.func @transform_2(%arg0: i32, %arg1: i32) -> (i32, i32) {
    %c0_i32 = arith.constant 0 : i32
    %c0_i32_0 = arith.constant 0 : i32
    return %arg1, %c0_i32 : i32, i32
  }
  func.func @transform_3(%arg0: i32, %arg1: i32) -> (i32, i32) {
    %c0_i32 = arith.constant 0 : i32
    return %arg0, %arg1 : i32, i32
  }
}

</mosaic_0001>

<llo_original>
// kernel: tpu_custom_call.1
$region0: #{tpu_custom_call.1}
  #allocation0 [shape = 'u32[]', space=smem, size = 0x4, offset = 0x4, fixed_abs, tag = 'smem constant byte address 0x4 - core index']
  #allocation1 [shape = 'u32[144,128]{1,0:T(1,128)}', space=vmem, size = 0x12000, scoped, tag = 'internal scratch']
  %s0 = inlined_call_operand.hbm [shape: f32[2], index: 0, kind: input, shape index: {}]
  %s1 = inlined_call_operand.hbm [shape: f32[16,128], index: 1, kind: input, shape index: {}]
  %s2 = inlined_call_operand.hbm [shape: f32[128,128], index: 2, kind: input, shape index: {}]
  %s3 = inlined_call_operand.hbm [shape: f32[16,128], index: 3, kind: output, shape index: {}]
  %s4 = sld [smem:[#allocation0]]
  $region57: #{tpu_custom_call.1} parent=0
    _
  %s6 = ssub.s32 1, %s4
  %s7 = scalar_select 0, %s6, %s4
  $region1: #{tpu_custom_call.1} parent=0
    #allocation2 [shape = 'u8[512]{0}', space=smem, size = 0x200, scoped, tag = 'input window, operand 0, single buffered']
    #allocation3 [shape = 's32[2]{0}', space=sflag, size = 0x8, scoped, tag = 'scoped memory for tpu_custom_call.1']
    #allocation4 [shape = 's32[2]{0}', space=sflag, size = 0x8, scoped, tag = 'scoped memory for tpu_custom_call.1']
    #allocation5 [shape = 's32[2]{0}', space=sflag, size = 0x8, scoped, tag = 'scoped memory for tpu_custom_call.1']
    #allocation6 [shape = 'u8[8192]{0}', space=vmem, size = 0x2000, scoped, tag = 'input window, operand 1']
    #allocation7 [shape = 'u8[65536]{0}', space=vmem, size = 0x10000, scoped, tag = 'input window, operand 2, single buffered']
    #allocation8 [shape = 's32[1]{0}', space=sflag, size = 0x4, scoped, tag = 'scoped memory for tpu_custom_call.1']
    #allocation9 [shape = 'u8[8192]{0}', space=vmem, size = 0x2000, scoped, tag = 'output window, operand 0']
    %8 = vsyncpa [#allocation5], 0
    %9 = vsyncpa [#allocation3], 0
    %s10 = scalar_lea.sflag [#allocation3], 1
    %11 = vsyncpa %s10, 0
    %12 = vsyncpa [#allocation8], 0
    %13 = vsyncpa [#allocation4], 0
    %s14 = scalar_lea.sflag [#allocation4], 1
    %15 = vsyncpa %s14, 0
    loop: start=0, step=1, limit=4
    $region2: #{tpu_custom_call.1} parent=1 // loop_pre_header
      _
    $region3: #{tpu_custom_call.1} parent=1 // loop_header
      %s17 = sphi 0, %s21
      %p18 = scmp.ge.s32.totalorder %s17, 4
      %s24 = sphi 0, %s36
      %s25 = sphi 0, %s32
      %s26 = sphi 0, %s24
      %s27 = sphi 0, %s25
      %s28 = sphi 0, %s26
      %s29 = sphi 0, %s27
      %s37 = sphi 0, %s37
      %s39 = sphi 0, %s37
      %s40 = sphi 0, %s39
      %s54 = sphi 0, %s40
      %s60 = sphi 0, %s62
      %s63 = sphi 0, %s60
      %s64 = sphi 0, %s63
      %s80 = sphi 0, %s64
      %s86 = sphi 0, %s88
      %s89 = sphi 0, %s86
      %s90 = sphi 0, %s89
      %s106 = sphi 0, %s90
      %s114 = sphi 0, %s116
      %s117 = sphi 0, %s114
      %s118 = sphi 0, %s117
      %s134 = sphi 0, %s118
    $region4: #{tpu_custom_call.1} parent=1 // loop_header_branch
      %20 = sbr.rel (%p18) target = $region8
    $region5: #{tpu_custom_call.1} parent=1 // loop_body
      %s22 = ssub.s32 %s17, 1
      %s23 = ssub.s32 %s17, 2
      %s30 = sadd.s32 1, %s25
      %p31 = scmp.ge.s32.totalorder %s30, 1
      %s32 = scalar_select %p31, 0, %s30
      %s33 = sadd.s32 1, %s24
      %s34 = scalar_select %p31, %s33, %s24
      %p35 = scmp.ge.s32.totalorder %s34, 2
      %s36 = scalar_select %p35, 0, %s34
      %s38 = sadd.s32 %s37, 1
      %p41 = scmp.eq.s32.totalorder %s17, 1
      %p42 = scmp.ne.s32.totalorder %s37, %s39
      %p43 = scmp.eq.s32.totalorder %s17, 0
      %p44 = por %p42, %p43
      %p45 = scmp.ne.s32.totalorder %s37, %s39
      %p46 = scmp.eq.s32.totalorder %s22, 1
      %p47 = por %p45, %p46
      %p48 = scmp.ne.s32.totalorder %s39, %s40
      %p49 = scmp.eq.s32.totalorder %s22, 0
      %p50 = por %p48, %p49
      %p51 = scmp.ne.s32.totalorder %s39, %s40
      %p52 = scmp.eq.s32.totalorder %s23, 1
      %p53 = por %p51, %p52
      %p55 = scmp.ne.s32.totalorder %s40, %s54
      %p56 = scmp.eq.s32.totalorder %s23, 0
      %p57 = por %p55, %p56
      %s58 = ssub.s32 %s24, %s36
      %p59 = scmp.eq.s32.totalorder %s58, 0
      %s61 = sadd.s32 %s60, 1
      %s62 = scalar_select %p59, %s60, %s61
      %p65 = pneg %p59
      %p66 = scmp.eq.s32.totalorder %s17, 1
      %p67 = por %p65, %p66
      %p68 = scmp.ne.s32.totalorder %s60, %s63
      %p69 = scmp.eq.s32.totalorder %s17, 0
      %p70 = por %p68, %p69
      %p71 = scmp.ne.s32.totalorder %s60, %s63
      %p72 = scmp.eq.s32.totalorder %s22, 1
      %p73 = por %p71, %p72
      %p74 = scmp.ne.s32.totalorder %s63, %s64
      %p75 = scmp.eq.s32.totalorder %s22, 0
      %p76 = por %p74, %p75
      %p77 = scmp.ne.s32.totalorder %s63, %s64
      %p78 = scmp.eq.s32.totalorder %s23, 1
      %p79 = por %p77, %p78
      %p81 = scmp.ne.s32.totalorder %s64, %s80
      %p82 = scmp.eq.s32.totalorder %s23, 0
      %p83 = por %p81, %p82
      %s84 = ssub.s32 %s25, %s32
      %p85 = scmp.eq.s32.totalorder %s84, 0
      %s87 = sadd.s32 %s86, 1
      %s88 = scalar_select %p85, %s86, %s87
      %p91 = pneg %p85
      %p92 = scmp.eq.s32.totalorder %s17, 1
      %p93 = por %p91, %p92
      %p94 = scmp.ne.s32.totalorder %s86, %s89
      %p95 = scmp.eq.s32.totalorder %s17, 0
      %p96 = por %p94, %p95
      %p97 = scmp.ne.s32.totalorder %s86, %s89
      %p98 = scmp.eq.s32.totalorder %s22, 1
      %p99 = por %p97, %p98
      %p100 = scmp.ne.s32.totalorder %s89, %s90
      %p101 = scmp.eq.s32.totalorder %s22, 0
      %p102 = por %p100, %p101
      %p103 = scmp.ne.s32.totalorder %s89, %s90
      %p104 = scmp.eq.s32.totalorder %s23, 1
      %p105 = por %p103, %p104
      %p107 = scmp.ne.s32.totalorder %s90, %s106
      %p108 = scmp.eq.s32.totalorder %s23, 0
      %p109 = por %p107, %p108
      %s110 = ssub.s32 %s24, %s36
      %s111 = ssub.s32 %s25, %s32
      %s112 = sor.u32 %s110, %s111
      %p113 = scmp.eq.s32.totalorder %s112, 0
      %s115 = sadd.s32 %s114, 1
      %s116 = scalar_select %p113, %s114, %s115
      %p119 = pneg %p113
      %p120 = scmp.eq.s32.totalorder %s17, 1
      %p121 = por %p119, %p120
      %p122 = scmp.ne.s32.totalorder %s114, %s117
      %p123 = scmp.eq.s32.totalorder %s17, 0
      %p124 = por %p122, %p123
      %p125 = scmp.ne.s32.totalorder %s114, %s117
      %p126 = scmp.eq.s32.totalorder %s22, 1
      %p127 = por %p125, %p126
      %p128 = scmp.ne.s32.totalorder %s117, %s118
      %p129 = scmp.eq.s32.totalorder %s22, 0
      %p130 = por %p128, %p129
      %p131 = scmp.ne.s32.totalorder %s117, %s118
      %p132 = scmp.eq.s32.totalorder %s23, 1
      %p133 = por %p131, %p132
      %p135 = scmp.ne.s32.totalorder %s118, %s134
      %p136 = scmp.eq.s32.totalorder %s23, 0
      %p137 = por %p135, %p136
      %p138 = scmp.le.s32.totalorder 1, %s17
      %p139 = scmp.lt.s32.totalorder %s17, 3
      %p140 = pnand %p138, %p139
      %p141 = pneg %p140
      // Predicated region
      $region9: #{tpu_custom_call.1} parent=5 // pred_check
        _
      $region10: #{tpu_custom_call.1} parent=5 // pred_check_branch
        %143 = sbr.rel (%p140) target = $region12
      $region11: #{tpu_custom_call.1} parent=5 // pred_region
        %s144 = ssub.s32 %s17, 1
        // Predicated region
        $region13: #{tpu_custom_call.1} parent=11 // pred_check
          %p145 = pneg %p50
        $region14: #{tpu_custom_call.1} parent=11 // pred_check_branch
          %147 = sbr.rel (%p145) target = $region16
        $region15: #{tpu_custom_call.1} parent=11 // pred_region
          %s149 = ssub.s32 16, 16
          %150 = vsyncadd [#allocation5], %s149
          %153 = dma.hbm_to_smem %s0, 16, [#allocation2], [#allocation5]
        $region16: #{tpu_custom_call.1} parent=11 // pred_fallthru
          _
        // Predicated region
        $region17: #{tpu_custom_call.1} parent=11 // pred_check
          %p154 = pneg %p102
        $region18: #{tpu_custom_call.1} parent=11 // pred_check_branch
          %156 = sbr.rel (%p154) target = $region20
        $region19: #{tpu_custom_call.1} parent=11 // pred_region
          %s157 = smul.u32 16, %s27
          %s159 = ssub.s32 2048, 2048
          %160 = vsyncadd [#allocation8], %s159
          %s161 = smul.addr %s157, 128
          %s162 = scalar_lea.hbm %s2, %s161
          %s163 = sshll.u32 [#allocation7], 4
          %s164 = int_to_ptr.vmem [resolvable:$true] %s163
          %169 = dma.hbm_to_vmem [thread:$0]  %s162, 2048, %s164, [#allocation8], 128, 128, 8
        $region20: #{tpu_custom_call.1} parent=11 // pred_fallthru
          _
      $region12: #{tpu_custom_call.1} parent=5 // pred_fallthru
        _
      %p170 = scmp.lt.s32.totalorder %s17, 2
      // Predicated region
      $region21: #{tpu_custom_call.1} parent=5 // pred_check
        %p171 = pneg %p170
      $region22: #{tpu_custom_call.1} parent=5 // pred_check_branch
        %173 = sbr.rel (%p171) target = $region24
      $region23: #{tpu_custom_call.1} parent=5 // pred_region
        // Predicated region
        $region25: #{tpu_custom_call.1} parent=23 // pred_check
          %p174 = pneg %p70
        $region26: #{tpu_custom_call.1} parent=23 // pred_check_branch
          %176 = sbr.rel (%p174) target = $region28
        $region27: #{tpu_custom_call.1} parent=23 // pred_region
          %s177 = sand.u32 %s60, 1
          %s178 = scalar_lea.sflag [#allocation3], %s177
          %s179 = sand.u32 %s60, 1
          %s180 = smul.addr %s179, 8
          %s181 = scalar_lea.vmem [#allocation6], %s180
          %s183 = ssub.s32 128, 128
          %184 = vsyncadd %s178, %s183
          %s185 = smul.addr %s24, 128
          %s186 = scalar_lea.hbm %s1, %s185
          %s188 = sshll.u32 %s181, 4
          %s189 = int_to_ptr.vmem [resolvable:$true] %s188
          %191 = dma.hbm_to_vmem [thread:$0]  %s186, 128, %s189, %s178
        $region28: #{tpu_custom_call.1} parent=23 // pred_fallthru
          _
      $region24: #{tpu_custom_call.1} parent=5 // pred_fallthru
        _
      %p192 = scmp.le.s32.totalorder 1, %s17
      %p193 = scmp.lt.s32.totalorder %s17, 3
      %p194 = pnand %p192, %p193
      %p195 = pneg %p194
      // Predicated region
      $region29: #{tpu_custom_call.1} parent=5 // pred_check
        _
      $region30: #{tpu_custom_call.1} parent=5 // pred_check_branch
        %197 = sbr.rel (%p194) target = $region32
      $region31: #{tpu_custom_call.1} parent=5 // pred_region
        %s198 = ssub.s32 %s17, 1
        // Predicated region
        $region33: #{tpu_custom_call.1} parent=31 // pred_check
          %p199 = pneg %p50
        $region34: #{tpu_custom_call.1} parent=31 // pred_check_branch
          %201 = sbr.rel (%p199) target = $region36
        $region35: #{tpu_custom_call.1} parent=31 // pred_region
          %202 = dma.done [#allocation5], 16
        $region36: #{tpu_custom_call.1} parent=31 // pred_fallthru
          _
        %s203 = sand.u32 %s63, 1
        %s204 = scalar_lea.sflag [#allocation3], %s203
        %s205 = sand.u32 %s63, 1
        %s206 = smul.addr %s205, 8
        %s207 = scalar_lea.vmem [#allocation6], %s206
        // Predicated region
        $region37: #{tpu_custom_call.1} parent=31 // pred_check
          %p208 = pneg %p76
        $region38: #{tpu_custom_call.1} parent=31 // pred_check_branch
          %210 = sbr.rel (%p208) target = $region40
        $region39: #{tpu_custom_call.1} parent=31 // pred_region
          %211 = dma.done %s204, 128
        $region40: #{tpu_custom_call.1} parent=31 // pred_fallthru
          _
        // Predicated region
        $region41: #{tpu_custom_call.1} parent=31 // pred_check
          %p212 = pneg %p102
        $region42: #{tpu_custom_call.1} parent=31 // pred_check_branch
          %214 = sbr.rel (%p212) target = $region44
        $region43: #{tpu_custom_call.1} parent=31 // pred_region
          %215 = dma.done [#allocation8], 2048
        $region44: #{tpu_custom_call.1} parent=31 // pred_fallthru
          _
        %216 = sfence
        %p217 = pneg %p50
        %p218 = pneg %p47
        %s219 = sand.u32 %s63, 1
        %s220 = scalar_lea.sflag [#allocation3], %s219
        %s221 = sand.u32 %s63, 1
        %s222 = smul.addr %s221, 8
        %s223 = scalar_lea.vmem [#allocation6], %s222
        %p224 = pneg %p76
        %p225 = pneg %p73
        %p226 = pneg %p102
        %p227 = pneg %p99
        %p228 = pneg %p130
        %p229 = pneg %p127
        %s230 = sand.u32 %s117, 1
        %s231 = scalar_lea.sflag [#allocation4], %s230
        %s232 = sand.u32 %s117, 1
        %s233 = smul.addr %s232, 8
        %s234 = scalar_lea.vmem [#allocation9], %s233
        %s235 = smul.u32 16, %s27
        %v236 = vld [vmem:[%s207] sm:$0xff]
        %v237 = vld [vmem:[#allocation7] sm:$0xff]
        %v238 = vld [vmem:[#allocation7 + $0x8] sm:$0xff]
        %v239 = vld [vmem:[#allocation7 + $0x10] sm:$0xff]
        %v240 = vld [vmem:[#allocation7 + $0x18] sm:$0xff]
        %v241 = vld [vmem:[#allocation7 + $0x20] sm:$0xff]
        %v242 = vld [vmem:[#allocation7 + $0x28] sm:$0xff]
        %v243 = vld [vmem:[#allocation7 + $0x30] sm:$0xff]
        %v244 = vld [vmem:[#allocation7 + $0x38] sm:$0xff]
        %v245 = vld [vmem:[#allocation7 + $0x40] sm:$0xff]
        %v246 = vld [vmem:[#allocation7 + $0x48] sm:$0xff]
        %v247 = vld [vmem:[#allocation7 + $0x50] sm:$0xff]
        %v248 = vld [vmem:[#allocation7 + $0x58] sm:$0xff]
        %v249 = vld [vmem:[#allocation7 + $0x60] sm:$0xff]
        %v250 = vld [vmem:[#allocation7 + $0x68] sm:$0xff]
        %v251 = vld [vmem:[#allocation7 + $0x70] sm:$0xff]
        %v252 = vld [vmem:[#allocation7 + $0x78] sm:$0xff]
        %253 = vmatprep.subr.mxu0 0.0
        %254 = vmatpush1.xpose.msra.mxu0 %v237
        %255 = vmatprep.subr.mxu0 0.0
        %256 = vmatpush1.xpose.msra.mxu0 %v238
        %257 = vmatprep.subr.mxu0 0.0
        %258 = vmatpush1.xpose.msra.mxu0 %v239
        %259 = vmatprep.subr.mxu0 0.0
        %260 = vmatpush1.xpose.msra.mxu0 %v240
        %261 = vmatprep.subr.mxu0 0.0
        %262 = vmatpush1.xpose.msra.mxu0 %v241
        %263 = vmatprep.subr.mxu0 0.0
        %264 = vmatpush1.xpose.msra.mxu0 %v242
        %265 = vmatprep.subr.mxu0 0.0
        %266 = vmatpush1.xpose.msra.mxu0 %v243
        %267 = vmatprep.subr.mxu0 0.0
        %268 = vmatpush1.xpose.msra.mxu0 %v244
        %269 = vmatprep.subr.mxu0 0.0
        %270 = vmatpush1.xpose.msra.mxu0 %v245
        %271 = vmatprep.subr.mxu0 0.0
        %272 = vmatpush1.xpose.msra.mxu0 %v246
        %273 = vmatprep.subr.mxu0 0.0
        %274 = vmatpush1.xpose.msra.mxu0 %v247
        %275 = vmatprep.subr.mxu0 0.0
        %276 = vmatpush1.xpose.msra.mxu0 %v248
        %277 = vmatprep.subr.mxu0 0.0
        %278 = vmatpush1.xpose.msra.mxu0 %v249
        %279 = vmatprep.subr.mxu0 0.0
        %280 = vmatpush1.xpose.msra.mxu0 %v250
        %281 = vmatprep.subr.mxu0 0.0
        %282 = vmatpush1.xpose.msra.mxu0 %v251
        %283 = vmatprep.subr.mxu0 0.0
        %284 = vmatpush1.xpose.msra.mxu0 %v252
        %285 = vmatprep.subr.mxu0 0.0
        %286 = vmatpush1.xpose.msra.mxu0 0.0
        %287 = vmatprep.subr.mxu0 0.0
        %288 = vmatpush1.xpose.msra.mxu0 0.0
        %289 = vmatprep.subr.mxu0 0.0
        %290 = vmatpush1.xpose.msra.mxu0 0.0
        %291 = vmatprep.subr.mxu0 0.0
        %292 = vmatpush1.xpose.msra.mxu0 0.0
        %293 = vmatprep.subr.mxu0 0.0
        %294 = vmatpush1.xpose.msra.mxu0 0.0
        %295 = vmatprep.subr.mxu0 0.0
        %296 = vmatpush1.xpose.msra.mxu0 0.0
        %297 = vmatprep.subr.mxu0 0.0
        %298 = vmatpush1.xpose.msra.mxu0 0.0
        %299 = vmatprep.subr.mxu0 0.0
        %300 = vmatpush1.xpose.msra.mxu0 0.0
        %301 = vmatprep.subr.mxu0 0.0
        %302 = vmatpush1.xpose.msra.mxu0 0.0
        %303 = vmatprep.subr.mxu0 0.0
        %304 = vmatpush1.xpose.msra.mxu0 0.0
        %305 = vmatprep.subr.mxu0 0.0
        %306 = vmatpush1.xpose.msra.mxu0 0.0
        %307 = vmatprep.subr.mxu0 0.0
        %308 = vmatpush1.xpose.msra.mxu0 0.0
        %309 = vmatprep.subr.mxu0 0.0
        %310 = vmatpush1.xpose.msra.mxu0 0.0
        %311 = vmatprep.subr.mxu0 0.0
        %312 = vmatpush1.xpose.msra.mxu0 0.0
        %313 = vmatprep.subr.mxu0 0.0
        %314 = vmatpush1.xpose.msra.mxu0 0.0
        %315 = vmatprep.subr.mxu0 0.0
        %316 = vmatpush1.xpose.msra.mxu0 0.0
        %317 = vmatprep.mubr.f32.mxu0 0.0
        %318 = vmatmul.mubr.f32.gmra.mrb[0].mxu0 %v236
        %v319 = vpop.f32.mrb[0].mxu0
        %v320 = vadd.f32 0.0, %v319
        %v321 = vpop.f32.mrb[0].mxu0
        %322 = vdwg.mxu0
        %s323 = sld [smem:[#allocation2]]
        %s324 = sld [smem:[#allocation2 + $0x1]]
        %s325 = smul.f32 %s324, %s324
        %v326 = vstv %s325
        %v327 = vmul.f32 %v326, %v320
        %v328 = vstv %s323
        %v329 = vadd.f32 %v327, %v328
        %330 = vst [vmem:[%s234] sm:$0xff] %v329
        %s331 = sand.u32 %s117, 1
        %s332 = scalar_lea.sflag [#allocation4], %s331
        %s333 = sand.u32 %s117, 1
        %s334 = smul.addr %s333, 8
        %s335 = scalar_lea.vmem [#allocation9], %s334
        // Predicated region
        $region45: #{tpu_custom_call.1} parent=31 // pred_check
          %p336 = pneg %p127
        $region46: #{tpu_custom_call.1} parent=31 // pred_check_branch
          %338 = sbr.rel (%p336) target = $region48
        $region47: #{tpu_custom_call.1} parent=31 // pred_region
          %s340 = ssub.s32 128, 128
          %341 = vsyncadd %s332, %s340
          %s342 = sadd.s32 %s27, %s26
          %s343 = smul.addr %s342, 128
          %s344 = scalar_lea.hbm %s3, %s343
          %s346 = sshll.u32 %s335, 4
          %s347 = int_to_ptr.vmem [resolvable:$true] %s346
          %349 = dma.vmem_to_hbm [thread:$0]  %s347, 128, %s344, %s332
        $region48: #{tpu_custom_call.1} parent=31 // pred_fallthru
          _
      $region32: #{tpu_custom_call.1} parent=5 // pred_fallthru
        _
      %p350 = scmp.le.s32.totalorder 2, %s17
      // Predicated region
      $region49: #{tpu_custom_call.1} parent=5 // pred_check
        %p351 = pneg %p350
      $region50: #{tpu_custom_call.1} parent=5 // pred_check_branch
        %353 = sbr.rel (%p351) target = $region52
      $region51: #{tpu_custom_call.1} parent=5 // pred_region
        %s354 = ssub.s32 %s17, 2
        // Predicated region
        $region53: #{tpu_custom_call.1} parent=51 // pred_check
          %p355 = pneg %p133
        $region54: #{tpu_custom_call.1} parent=51 // pred_check_branch
          %357 = sbr.rel (%p355) target = $region56
        $region55: #{tpu_custom_call.1} parent=51 // pred_region
          %s358 = sand.u32 %s118, 1
          %s359 = scalar_lea.sflag [#allocation4], %s358
          %s360 = sand.u32 %s118, 1
          %s361 = smul.addr %s360, 8
          %s362 = scalar_lea.vmem [#allocation9], %s361
          %363 = dma.done %s359, 128
        $region56: #{tpu_custom_call.1} parent=51 // pred_fallthru
          _
      $region52: #{tpu_custom_call.1} parent=5 // pred_fallthru
        _
    $region6: #{tpu_custom_call.1} parent=1 // loop_footer
      %s21 = sadd.s32 1, %s17
    $region7: #{tpu_custom_call.1} parent=1 // loop_footer_branch
      %16 = sbr.rel target = $region3
    $region8: #{tpu_custom_call.1} parent=1 // loop_exit
      _
    %364 = vsyncpa [#allocation3], 1
    %s365 = scalar_lea.sflag [#allocation3], 1
    %366 = vsyncpa %s365, 1
    %367 = vsyncpa [#allocation8], 1
    %368 = vsyncpa [#allocation4], 1
    %s369 = scalar_lea.sflag [#allocation4], 1
    %370 = vsyncpa %s369, 1
    %371 = vsyncpa [#allocation5], 1
    %s372 = scalar_lea.sflag [#allocation5], 1
    %373 = vsyncpa %s372, 1

</llo_original>
